<compile_context>
chip_gen: v7x
topology: tpu7x:2x2x1
jax: 0.10.0
libtpu: 0.0.40
codegen_flags: <defaults>
</compile_context>

<pallas_src>
import functools

import jax
import jax.numpy as jnp
from jax.experimental import pallas as pl
from jax.experimental.pallas import tpu as pltpu  # noqa: F401  (TPU backend)

EPS = 1e-5
LANE = 128


def _round_up(x, m):
    return ((x + m - 1) // m) * m


def _bn_sigmoid(y, g, be):
    """Training-mode BatchNorm1d (biased variance) folded to scale/shift, then sigmoid.

    y : (B, F) f32 pre-activation;  g, be : (1, F) f32 BN affine params.
    """
    mean = jnp.mean(y, axis=0, keepdims=True)                 # (1, F)
    mean_sq = jnp.mean(y * y, axis=0, keepdims=True)          # (1, F) single pass
    var = jnp.maximum(mean_sq - mean * mean, 0.0)             # clamp cancellation
    scale = g * jax.lax.rsqrt(var + EPS)                      # (1, F)
    shift = be - mean * scale                                 # (1, F)
    z = y * scale + shift                                     # fused BN affine
    # sigmoid(z) = 1 / (1 + exp(-z)); exp and reciprocal both run on the EUP.
    return pl.reciprocal(1.0 + jnp.exp(-z), approx=True)


def _generator_kernel(feat_dims, noise_ref, inp_ref,
                      w1n_ref, w1i_ref, w2_ref, w3_ref, w4_ref,
                      gb_ref, out_ref):
    # feat_dims are the *padded* per-layer widths (multiples of 128).
    f1, f2, f3, f4 = feat_dims
    cdt = w1n_ref.dtype                      # MXU input dtype (bf16)

    xn = noise_ref[...].astype(cdt)
    xi = inp_ref[...].astype(cdt)
    # Layer 1: concat(noise, input) @ W1  ==  noise @ W1n + input @ W1i
    y = (jnp.dot(xn, w1n_ref[...], preferred_element_type=jnp.float32)
         + jnp.dot(xi, w1i_ref[...], preferred_element_type=jnp.float32))
    h = _bn_sigmoid(y, gb_ref[0:1, :f1], gb_ref[1:2, :f1])

    y = jnp.dot(h.astype(cdt), w2_ref[...], preferred_element_type=jnp.float32)
    h = _bn_sigmoid(y, gb_ref[2:3, :f2], gb_ref[3:4, :f2])

    y = jnp.dot(h.astype(cdt), w3_ref[...], preferred_element_type=jnp.float32)
    h = _bn_sigmoid(y, gb_ref[4:5, :f3], gb_ref[5:6, :f3])

    y = jnp.dot(h.astype(cdt), w4_ref[...], preferred_element_type=jnp.float32)
    h = _bn_sigmoid(y, gb_ref[6:7, :f4], gb_ref[7:8, :f4])

    out_ref[...] = h.astype(out_ref.dtype)


def _full_spec(shape):
    # Whole-array block, single grid point.
    return pl.BlockSpec(shape, lambda: (0,) * len(shape))


def generator_forward(noise, input_tensor, kernel_weights, gb_slab,
                      padded_feat_dims, im_chan, adj_size):
    """Pallas implementation of Generator.forward (BatchNorm in training mode).

    kernel_weights: (w1_noise, w1_input, w2, w3, w4), each (in, out_padded), bf16.
    gb_slab: (8, F_pad) f32; row 2l = gamma of layer l, row 2l+1 = beta of layer l.
    padded_feat_dims: per-layer feature widths rounded up to 128.
    """
    B = noise.shape[0]
    out_feat = im_chan * adj_size[0] * adj_size[1]
    fp_out = padded_feat_dims[-1]

    args = (noise, input_tensor) + tuple(kernel_weights) + (gb_slab,)

    out = pl.pallas_call(
        functools.partial(_generator_kernel, padded_feat_dims),
        out_shape=jax.ShapeDtypeStruct((B, fp_out), jnp.float32),
        grid=(),
        in_specs=[_full_spec(a.shape) for a in args],
        out_specs=_full_spec((B, fp_out)),
    )(*args)

    # PyTorch: gen_output.view(B, -1, adj0, adj1) (NCHW); the padded columns
    # (exactly 0.5 each) are dropped here, kernel stores stay unmasked.
    return out[:, :out_feat].reshape(B, im_chan, adj_size[0], adj_size[1])


# -------------------------- parameter construction --------------------------

def init_params(key, z_dim, input_dim, hidden_dim, im_chan, adj_size,
                weight_dtype=jnp.bfloat16, perturb_bn=False):
    """Mirrors weights_init: Linear.weight ~ xavier_normal, Linear.bias = 0
    (bias is dropped here -- exactly cancelled by train-mode BN).  BatchNorm1d
    defaults to weight=1, bias=0; `perturb_bn=True` draws non-trivial values so
    the affine path is actually exercised (forward semantics unchanged -- they
    are just learnable parameters)."""
    dims = [z_dim + input_dim, hidden_dim * 4, hidden_dim * 2, hidden_dim,
            im_chan * adj_size[0] * adj_size[1]]
    weights, gammas, betas = [], [], []
    for i in range(4):
        fan_in, fan_out = dims[i], dims[i + 1]
        key, kw = jax.random.split(key)
        std = jnp.sqrt(2.0 / (fan_in + fan_out))        # xavier_normal std
        # Stored as (in, out) so the kernel does x @ w (== x @ W.T in PyTorch).
        w = std * jax.random.normal(kw, (fan_in, fan_out), jnp.float32)
        weights.append(w.astype(weight_dtype))
        if perturb_bn:
            key, kg, kb = jax.random.split(key, 3)
            gammas.append(1.0 + 0.05 * jax.random.normal(kg, (fan_out,), jnp.float32))
            betas.append(0.05 * jax.random.normal(kb, (fan_out,), jnp.float32))
        else:
            gammas.append(jnp.ones((fan_out,), jnp.float32))
            betas.append(jnp.zeros((fan_out,), jnp.float32))
    return weights, gammas, betas


def prepare_kernel_params(weights, gammas, betas, z_dim):
    """One-time (outside the hot path) packing/padding of module params.

    Zero-pads every layer's output width up to a multiple of 128 lanes and the
    corresponding next-layer input rows, so the kernel only ever touches
    lane-dense tiles.  Padded gamma/beta are zero -> padded activations are a
    constant 0.5 that the (zero) padded weight rows of the next layer ignore.
    """
    feat = [w.shape[1] for w in weights]
    fp = [_round_up(f, LANE) for f in feat]

    padded = []
    for l, w in enumerate(weights):
        k_in = w.shape[0] if l == 0 else fp[l - 1]
        wp = jnp.zeros((k_in, fp[l]), w.dtype)
        wp = wp.at[: w.shape[0], : w.shape[1]].set(w)
        padded.append(wp)

    # Split W1 so the kernel never needs the concatenated (B, z+in) input.
    w1n, w1i = padded[0][:z_dim], padded[0][z_dim:]
    kernel_weights = (w1n, w1i, padded[1], padded[2], padded[3])

    # Pack all gamma/beta vectors into one lane-dense (8, max F_pad) f32 slab.
    gb = jnp.zeros((8, max(fp)), jnp.float32)
    for l, f in enumerate(feat):
        gb = gb.at[2 * l, :f].set(gammas[l])
        gb = gb.at[2 * l + 1, :f].set(betas[l])
    return kernel_weights, gb, tuple(fp)


# ------------------------------ pure-JAX reference ---------------------------

def _ref_forward(noise, input_tensor, weights, gammas, betas, im_chan, adj_size):
    """Reference in f32 (weights upcast from their stored dtype)."""
    x = jnp.concatenate([noise, input_tensor], axis=1).astype(jnp.float32)
    for w, g, be in zip(weights, gammas, betas):
        y = x @ w.astype(jnp.float32)                       # bias == 0 in the module init
        mean = jnp.mean(y, axis=0, keepdims=True)
        var = jnp.mean((y - mean) ** 2, axis=0, keepdims=True)   # biased var
        x = jax.nn.sigmoid(g * (y - mean) / jnp.sqrt(var + EPS) + be)
    return x.reshape(x.shape[0], im_chan, adj_size[0], adj_size[1])


if __name__ == "__main__":
    # Small shapes consistent with the module.
    z_dim = 10
    input_dim = 10          # input_dim defaults to z_dim
    hidden_dim = 32
    im_chan = 1
    adj_size = (4, 4)
    B = 8

    key = jax.random.PRNGKey(0)
    k_noise, k_inp, k_param = jax.random.split(key, 3)

    noise = jax.random.normal(k_noise, (B, z_dim), dtype=jnp.float32)
    # forward() would draw torch.randn if input_tensor is None; pass it
    # explicitly for determinism.
    # TODO(synk): the implicit torch.randn(...) fallback for input_tensor=None
    # is not reproduced inside the kernel (deterministic explicit input used).
    input_tensor = jax.random.normal(k_inp, (B, input_dim), dtype=jnp.float32)

    weights, gammas, betas = init_params(
        k_param, z_dim, input_dim, hidden_dim, im_chan, adj_size,
        weight_dtype=jnp.bfloat16, perturb_bn=True)
    kernel_weights, gb_slab, padded_feat_dims = prepare_kernel_params(
        weights, gammas, betas, z_dim)

    out = generator_forward(noise, input_tensor, kernel_weights, gb_slab,
                            padded_feat_dims, im_chan, adj_size)
    out = jax.block_until_ready(out)

    ref = _ref_forward(noise, input_tensor, weights, gammas, betas,
                       im_chan, adj_size)
    assert out.shape == (B, im_chan, adj_size[0], adj_size[1]), out.shape
    # bf16 MXU inputs + approx EUP reciprocal vs. an f32 reference -> modest tol.
    max_err = float(jnp.max(jnp.abs(out - ref)))
    assert max_err < 2e-2, f"mismatch vs reference: max abs err = {max_err}"

    print("KERNEL_OK")
</pallas_src>

<mosaic_0001>
module attributes {stable_mosaic.version = 11 : i64} {
  func.func @_generator_kernel(%arg0: memref<8x10xf32, #tpu.memory_space<vmem>>, %arg1: memref<8x10xf32, #tpu.memory_space<vmem>>, %arg2: memref<10x128xbf16, #tpu.memory_space<vmem>>, %arg3: memref<10x128xbf16, #tpu.memory_space<vmem>>, %arg4: memref<128x128xbf16, #tpu.memory_space<vmem>>, %arg5: memref<128x128xbf16, #tpu.memory_space<vmem>>, %arg6: memref<128x128xbf16, #tpu.memory_space<vmem>>, %arg7: memref<8x128xf32, #tpu.memory_space<vmem>>, %arg8: memref<8x128xf32, #tpu.memory_space<vmem>>) attributes {dimension_semantics = [], scalar_prefetch = 0 : i64, scratch_operands = 0 : i64, tpu.core_type = #tpu.core_type<tc>} {
    %c0 = arith.constant 0 : index
    %c0_0 = arith.constant 0 : index
    %0 = vector.load %arg0[%c0, %c0_0] : memref<8x10xf32, #tpu.memory_space<vmem>>, vector<8x10xf32>
    %1 = arith.truncf %0 : vector<8x10xf32> to vector<8x10xbf16>
    %c0_1 = arith.constant 0 : index
    %c0_2 = arith.constant 0 : index
    %2 = vector.load %arg1[%c0_1, %c0_2] : memref<8x10xf32, #tpu.memory_space<vmem>>, vector<8x10xf32>
    %3 = arith.truncf %2 : vector<8x10xf32> to vector<8x10xbf16>
    %c0_3 = arith.constant 0 : index
    %c0_4 = arith.constant 0 : index
    %4 = vector.load %arg2[%c0_3, %c0_4] : memref<10x128xbf16, #tpu.memory_space<vmem>>, vector<10x128xbf16>
    %cst = arith.constant dense<0.000000e+00> : vector<8x128xf32>
    %5 = tpu.matmul %1, %4, %cst {dimension_numbers = #tpu.dot_dimension_numbers<[1], [0], [0], [1], [0, 0, 1, 1], [], []>} : vector<8x10xbf16>, vector<10x128xbf16>, vector<8x128xf32> -> vector<8x128xf32>
    %c0_5 = arith.constant 0 : index
    %c0_6 = arith.constant 0 : index
    %6 = vector.load %arg3[%c0_5, %c0_6] : memref<10x128xbf16, #tpu.memory_space<vmem>>, vector<10x128xbf16>
    %cst_7 = arith.constant dense<0.000000e+00> : vector<8x128xf32>
    %7 = tpu.matmul %3, %6, %cst_7 {dimension_numbers = #tpu.dot_dimension_numbers<[1], [0], [0], [1], [0, 0, 1, 1], [], []>} : vector<8x10xbf16>, vector<10x128xbf16>, vector<8x128xf32> -> vector<8x128xf32>
    %8 = arith.addf %5, %7 : vector<8x128xf32>
    %c0_8 = arith.constant 0 : index
    %c0_9 = arith.constant 0 : index
    %9 = vector.load %arg7[%c0_8, %c0_9] : memref<8x128xf32, #tpu.memory_space<vmem>>, vector<1x128xf32>
    %c1 = arith.constant 1 : index
    %c0_10 = arith.constant 0 : index
    %10 = vector.load %arg7[%c1, %c0_10] : memref<8x128xf32, #tpu.memory_space<vmem>>, vector<1x128xf32>
    %cst_11 = arith.constant dense<0.000000e+00> : vector<128xf32>
    %11 = vector.multi_reduction <add>, %8, %cst_11 [0] : vector<8x128xf32> to vector<128xf32>
    %12 = vector.shape_cast %11 : vector<128xf32> to vector<1x128xf32>
    %cst_12 = arith.constant 8.000000e+00 : f32
    %13 = vector.broadcast %cst_12 : f32 to vector<1x128xf32>
    %14 = arith.divf %12, %13 : vector<1x128xf32>
    %15 = arith.mulf %8, %8 : vector<8x128xf32>
    %cst_13 = arith.constant dense<0.000000e+00> : vector<128xf32>
    %16 = vector.multi_reduction <add>, %15, %cst_13 [0] : vector<8x128xf32> to vector<128xf32>
    %17 = vector.shape_cast %16 : vector<128xf32> to vector<1x128xf32>
    %cst_14 = arith.constant 8.000000e+00 : f32
    %18 = vector.broadcast %cst_14 : f32 to vector<1x128xf32>
    %19 = arith.divf %17, %18 : vector<1x128xf32>
    %20 = arith.mulf %14, %14 : vector<1x128xf32>
    %21 = arith.subf %19, %20 : vector<1x128xf32>
    %cst_15 = arith.constant 0.000000e+00 : f32
    %22 = vector.broadcast %cst_15 : f32 to vector<1x128xf32>
    %23 = arith.maximumf %21, %22 : vector<1x128xf32>
    %cst_16 = arith.constant 9.99999974E-6 : f32
    %24 = vector.broadcast %cst_16 : f32 to vector<1x128xf32>
    %25 = arith.addf %23, %24 : vector<1x128xf32>
    %26 = math.rsqrt %25 : vector<1x128xf32>
    %27 = arith.mulf %9, %26 : vector<1x128xf32>
    %28 = arith.mulf %14, %27 : vector<1x128xf32>
    %29 = arith.subf %10, %28 : vector<1x128xf32>
    %30 = vector.broadcast %27 : vector<1x128xf32> to vector<8x128xf32>
    %31 = arith.mulf %8, %30 : vector<8x128xf32>
    %32 = vector.broadcast %29 : vector<1x128xf32> to vector<8x128xf32>
    %33 = arith.addf %31, %32 : vector<8x128xf32>
    %cst_17 = arith.constant 0.000000e+00 : f32
    %34 = vector.broadcast %cst_17 : f32 to vector<8x128xf32>
    %35 = arith.subf %34, %33 : vector<8x128xf32>
    %36 = math.exp %35 : vector<8x128xf32>
    %cst_18 = arith.constant 1.000000e+00 : f32
    %37 = vector.broadcast %cst_18 : f32 to vector<8x128xf32>
    %38 = arith.addf %37, %36 : vector<8x128xf32>
    %39 = tpu.reciprocal %38 {approx = true} : vector<8x128xf32> -> vector<8x128xf32>
    %40 = arith.truncf %39 : vector<8x128xf32> to vector<8x128xbf16>
    %c0_19 = arith.constant 0 : index
    %c0_20 = arith.constant 0 : index
    %41 = vector.load %arg4[%c0_19, %c0_20] : memref<128x128xbf16, #tpu.memory_space<vmem>>, vector<128x128xbf16>
    %cst_21 = arith.constant dense<0.000000e+00> : vector<8x128xf32>
    %42 = tpu.matmul %40, %41, %cst_21 {dimension_numbers = #tpu.dot_dimension_numbers<[1], [0], [0], [1], [0, 0, 1, 1], [], []>} : vector<8x128xbf16>, vector<128x128xbf16>, vector<8x128xf32> -> vector<8x128xf32>
    %c2 = arith.constant 2 : index
    %c0_22 = arith.constant 0 : index
    %43 = vector.load %arg7[%c2, %c0_22] : memref<8x128xf32, #tpu.memory_space<vmem>>, vector<1x128xf32>
    %c3 = arith.constant 3 : index
    %c0_23 = arith.constant 0 : index
    %44 = vector.load %arg7[%c3, %c0_23] : memref<8x128xf32, #tpu.memory_space<vmem>>, vector<1x128xf32>
    %cst_24 = arith.constant dense<0.000000e+00> : vector<128xf32>
    %45 = vector.multi_reduction <add>, %42, %cst_24 [0] : vector<8x128xf32> to vector<128xf32>
    %46 = vector.shape_cast %45 : vector<128xf32> to vector<1x128xf32>
    %cst_25 = arith.constant 8.000000e+00 : f32
    %47 = vector.broadcast %cst_25 : f32 to vector<1x128xf32>
    %48 = arith.divf %46, %47 : vector<1x128xf32>
    %49 = arith.mulf %42, %42 : vector<8x128xf32>
    %cst_26 = arith.constant dense<0.000000e+00> : vector<128xf32>
    %50 = vector.multi_reduction <add>, %49, %cst_26 [0] : vector<8x128xf32> to vector<128xf32>
    %51 = vector.shape_cast %50 : vector<128xf32> to vector<1x128xf32>
    %cst_27 = arith.constant 8.000000e+00 : f32
    %52 = vector.broadcast %cst_27 : f32 to vector<1x128xf32>
    %53 = arith.divf %51, %52 : vector<1x128xf32>
    %54 = arith.mulf %48, %48 : vector<1x128xf32>
    %55 = arith.subf %53, %54 : vector<1x128xf32>
    %cst_28 = arith.constant 0.000000e+00 : f32
    %56 = vector.broadcast %cst_28 : f32 to vector<1x128xf32>
    %57 = arith.maximumf %55, %56 : vector<1x128xf32>
    %cst_29 = arith.constant 9.99999974E-6 : f32
    %58 = vector.broadcast %cst_29 : f32 to vector<1x128xf32>
    %59 = arith.addf %57, %58 : vector<1x128xf32>
    %60 = math.rsqrt %59 : vector<1x128xf32>
    %61 = arith.mulf %43, %60 : vector<1x128xf32>
    %62 = arith.mulf %48, %61 : vector<1x128xf32>
    %63 = arith.subf %44, %62 : vector<1x128xf32>
    %64 = vector.broadcast %61 : vector<1x128xf32> to vector<8x128xf32>
    %65 = arith.mulf %42, %64 : vector<8x128xf32>
    %66 = vector.broadcast %63 : vector<1x128xf32> to vector<8x128xf32>
    %67 = arith.addf %65, %66 : vector<8x128xf32>
    %cst_30 = arith.constant 0.000000e+00 : f32
    %68 = vector.broadcast %cst_30 : f32 to vector<8x128xf32>
    %69 = arith.subf %68, %67 : vector<8x128xf32>
    %70 = math.exp %69 : vector<8x128xf32>
    %cst_31 = arith.constant 1.000000e+00 : f32
    %71 = vector.broadcast %cst_31 : f32 to vector<8x128xf32>
    %72 = arith.addf %71, %70 : vector<8x128xf32>
    %73 = tpu.reciprocal %72 {approx = true} : vector<8x128xf32> -> vector<8x128xf32>
    %74 = arith.truncf %73 : vector<8x128xf32> to vector<8x128xbf16>
    %c0_32 = arith.constant 0 : index
    %c0_33 = arith.constant 0 : index
    %75 = vector.load %arg5[%c0_32, %c0_33] : memref<128x128xbf16, #tpu.memory_space<vmem>>, vector<128x128xbf16>
    %cst_34 = arith.constant dense<0.000000e+00> : vector<8x128xf32>
    %76 = tpu.matmul %74, %75, %cst_34 {dimension_numbers = #tpu.dot_dimension_numbers<[1], [0], [0], [1], [0, 0, 1, 1], [], []>} : vector<8x128xbf16>, vector<128x128xbf16>, vector<8x128xf32> -> vector<8x128xf32>
    %c4 = arith.constant 4 : index
    %c0_35 = arith.constant 0 : index
    %77 = vector.load %arg7[%c4, %c0_35] : memref<8x128xf32, #tpu.memory_space<vmem>>, vector<1x128xf32>
    %c5 = arith.constant 5 : index
    %c0_36 = arith.constant 0 : index
    %78 = vector.load %arg7[%c5, %c0_36] : memref<8x128xf32, #tpu.memory_space<vmem>>, vector<1x128xf32>
    %cst_37 = arith.constant dense<0.000000e+00> : vector<128xf32>
    %79 = vector.multi_reduction <add>, %76, %cst_37 [0] : vector<8x128xf32> to vector<128xf32>
    %80 = vector.shape_cast %79 : vector<128xf32> to vector<1x128xf32>
    %cst_38 = arith.constant 8.000000e+00 : f32
    %81 = vector.broadcast %cst_38 : f32 to vector<1x128xf32>
    %82 = arith.divf %80, %81 : vector<1x128xf32>
    %83 = arith.mulf %76, %76 : vector<8x128xf32>
    %cst_39 = arith.constant dense<0.000000e+00> : vector<128xf32>
    %84 = vector.multi_reduction <add>, %83, %cst_39 [0] : vector<8x128xf32> to vector<128xf32>
    %85 = vector.shape_cast %84 : vector<128xf32> to vector<1x128xf32>
    %cst_40 = arith.constant 8.000000e+00 : f32
    %86 = vector.broadcast %cst_40 : f32 to vector<1x128xf32>
    %87 = arith.divf %85, %86 : vector<1x128xf32>
    %88 = arith.mulf %82, %82 : vector<1x128xf32>
    %89 = arith.subf %87, %88 : vector<1x128xf32>
    %cst_41 = arith.constant 0.000000e+00 : f32
    %90 = vector.broadcast %cst_41 : f32 to vector<1x128xf32>
    %91 = arith.maximumf %89, %90 : vector<1x128xf32>
    %cst_42 = arith.constant 9.99999974E-6 : f32
    %92 = vector.broadcast %cst_42 : f32 to vector<1x128xf32>
    %93 = arith.addf %91, %92 : vector<1x128xf32>
    %94 = math.rsqrt %93 : vector<1x128xf32>
    %95 = arith.mulf %77, %94 : vector<1x128xf32>
    %96 = arith.mulf %82, %95 : vector<1x128xf32>
    %97 = arith.subf %78, %96 : vector<1x128xf32>
    %98 = vector.broadcast %95 : vector<1x128xf32> to vector<8x128xf32>
    %99 = arith.mulf %76, %98 : vector<8x128xf32>
    %100 = vector.broadcast %97 : vector<1x128xf32> to vector<8x128xf32>
    %101 = arith.addf %99, %100 : vector<8x128xf32>
    %cst_43 = arith.constant 0.000000e+00 : f32
    %102 = vector.broadcast %cst_43 : f32 to vector<8x128xf32>
    %103 = arith.subf %102, %101 : vector<8x128xf32>
    %104 = math.exp %103 : vector<8x128xf32>
    %cst_44 = arith.constant 1.000000e+00 : f32
    %105 = vector.broadcast %cst_44 : f32 to vector<8x128xf32>
    %106 = arith.addf %105, %104 : vector<8x128xf32>
    %107 = tpu.reciprocal %106 {approx = true} : vector<8x128xf32> -> vector<8x128xf32>
    %108 = arith.truncf %107 : vector<8x128xf32> to vector<8x128xbf16>
    %c0_45 = arith.constant 0 : index
    %c0_46 = arith.constant 0 : index
    %109 = vector.load %arg6[%c0_45, %c0_46] : memref<128x128xbf16, #tpu.memory_space<vmem>>, vector<128x128xbf16>
    %cst_47 = arith.constant dense<0.000000e+00> : vector<8x128xf32>
    %110 = tpu.matmul %108, %109, %cst_47 {dimension_numbers = #tpu.dot_dimension_numbers<[1], [0], [0], [1], [0, 0, 1, 1], [], []>} : vector<8x128xbf16>, vector<128x128xbf16>, vector<8x128xf32> -> vector<8x128xf32>
    %c6 = arith.constant 6 : index
    %c0_48 = arith.constant 0 : index
    %111 = vector.load %arg7[%c6, %c0_48] : memref<8x128xf32, #tpu.memory_space<vmem>>, vector<1x128xf32>
    %c7 = arith.constant 7 : index
    %c0_49 = arith.constant 0 : index
    %112 = vector.load %arg7[%c7, %c0_49] : memref<8x128xf32, #tpu.memory_space<vmem>>, vector<1x128xf32>
    %cst_50 = arith.constant dense<0.000000e+00> : vector<128xf32>
    %113 = vector.multi_reduction <add>, %110, %cst_50 [0] : vector<8x128xf32> to vector<128xf32>
    %114 = vector.shape_cast %113 : vector<128xf32> to vector<1x128xf32>
    %cst_51 = arith.constant 8.000000e+00 : f32
    %115 = vector.broadcast %cst_51 : f32 to vector<1x128xf32>
    %116 = arith.divf %114, %115 : vector<1x128xf32>
    %117 = arith.mulf %110, %110 : vector<8x128xf32>
    %cst_52 = arith.constant dense<0.000000e+00> : vector<128xf32>
    %118 = vector.multi_reduction <add>, %117, %cst_52 [0] : vector<8x128xf32> to vector<128xf32>
    %119 = vector.shape_cast %118 : vector<128xf32> to vector<1x128xf32>
    %cst_53 = arith.constant 8.000000e+00 : f32
    %120 = vector.broadcast %cst_53 : f32 to vector<1x128xf32>
    %121 = arith.divf %119, %120 : vector<1x128xf32>
    %122 = arith.mulf %116, %116 : vector<1x128xf32>
    %123 = arith.subf %121, %122 : vector<1x128xf32>
    %cst_54 = arith.constant 0.000000e+00 : f32
    %124 = vector.broadcast %cst_54 : f32 to vector<1x128xf32>
    %125 = arith.maximumf %123, %124 : vector<1x128xf32>
    %cst_55 = arith.constant 9.99999974E-6 : f32
    %126 = vector.broadcast %cst_55 : f32 to vector<1x128xf32>
    %127 = arith.addf %125, %126 : vector<1x128xf32>
    %128 = math.rsqrt %127 : vector<1x128xf32>
    %129 = arith.mulf %111, %128 : vector<1x128xf32>
    %130 = arith.mulf %116, %129 : vector<1x128xf32>
    %131 = arith.subf %112, %130 : vector<1x128xf32>
    %132 = vector.broadcast %129 : vector<1x128xf32> to vector<8x128xf32>
    %133 = arith.mulf %110, %132 : vector<8x128xf32>
    %134 = vector.broadcast %131 : vector<1x128xf32> to vector<8x128xf32>
    %135 = arith.addf %133, %134 : vector<8x128xf32>
    %cst_56 = arith.constant 0.000000e+00 : f32
    %136 = vector.broadcast %cst_56 : f32 to vector<8x128xf32>
    %137 = arith.subf %136, %135 : vector<8x128xf32>
    %138 = math.exp %137 : vector<8x128xf32>
    %cst_57 = arith.constant 1.000000e+00 : f32
    %139 = vector.broadcast %cst_57 : f32 to vector<8x128xf32>
    %140 = arith.addf %139, %138 : vector<8x128xf32>
    %141 = tpu.reciprocal %140 {approx = true} : vector<8x128xf32> -> vector<8x128xf32>
    %c0_58 = arith.constant 0 : index
    %c0_59 = arith.constant 0 : index
    %142 = vector.load %arg8[%c0_58, %c0_59] : memref<8x128xf32, #tpu.memory_space<vmem>>, vector<8x128xf32>
    tpu.vector_store %arg8[%c0_58, %c0_59], %141 {strides = array<i32>} : memref<8x128xf32, #tpu.memory_space<vmem>>, vector<8x128xf32>,
    return
  }
}

</mosaic_0001>

<llo_original>
// kernel: tpu_custom_call.1
$region0: #{tpu_custom_call.1}
  #allocation0 [shape = 'u32[]', space=smem, size = 0x4, offset = 0x4, fixed_abs, tag = 'smem constant byte address 0x4 - core index']
  #allocation1 [shape = 'u32[144,128]{1,0:T(1,128)}', space=vmem, size = 0x12000, scoped, tag = 'internal scratch']
  %s0 = inlined_call_operand.hbm [shape: f32[8,10], index: 0, kind: input, shape index: {}]
  %s1 = inlined_call_operand.hbm [shape: f32[8,10], index: 1, kind: input, shape index: {}]
  %s2 = inlined_call_operand.hbm [shape: bf16[10,128], index: 2, kind: input, shape index: {}]
  %s3 = inlined_call_operand.vmem [shape: bf16[10,128], index: 3, kind: input, shape index: {}]
  %s4 = inlined_call_operand.hbm [shape: bf16[128,128], index: 4, kind: input, shape index: {}]
  %s5 = inlined_call_operand.hbm [shape: bf16[128,128], index: 5, kind: input, shape index: {}]
  %s6 = inlined_call_operand.hbm [shape: bf16[128,128], index: 6, kind: input, shape index: {}]
  %s7 = inlined_call_operand.vmem [shape: f32[8,128], index: 7, kind: input, shape index: {}]
  %s8 = inlined_call_operand.hbm [shape: f32[8,128], index: 8, kind: output, shape index: {}]
  %s9 = sld [smem:[#allocation0]]
  $region66: #{tpu_custom_call.1} parent=0
    _
  %s11 = ssub.s32 1, %s9
  %s12 = scalar_select 0, %s11, %s9
  $region1: #{tpu_custom_call.1} parent=0
    #allocation2 [shape = 'u8[4096]{0}', space=vmem, size = 0x1000, scoped, tag = 'input window, operand 0, single buffered']
    #allocation3 [shape = 's32[1]{0}', space=sflag, size = 0x4, scoped, tag = 'scoped memory for tpu_custom_call.1']
    #allocation4 [shape = 's32[1]{0}', space=sflag, size = 0x4, scoped, tag = 'scoped memory for tpu_custom_call.1']
    #allocation5 [shape = 'u8[4096]{0}', space=vmem, size = 0x1000, scoped, tag = 'input window, operand 1, single buffered']
    #allocation6 [shape = 's32[1]{0}', space=sflag, size = 0x4, scoped, tag = 'scoped memory for tpu_custom_call.1']
    #allocation7 [shape = 'u8[4096]{0}', space=vmem, size = 0x1000, scoped, tag = 'input window, operand 2, single buffered']
    #allocation8 [shape = 'u8[32768]{0}', space=vmem, size = 0x8000, scoped, tag = 'input window, operand 4, single buffered']
    #allocation9 [shape = 's32[1]{0}', space=sflag, size = 0x4, scoped, tag = 'scoped memory for tpu_custom_call.1']
    #allocation10 [shape = 'u8[32768]{0}', space=vmem, size = 0x8000, scoped, tag = 'input window, operand 5, single buffered']
    #allocation11 [shape = 'u8[32768]{0}', space=vmem, size = 0x8000, scoped, tag = 'input window, operand 6, single buffered']
    #allocation12 [shape = 's32[1]{0}', space=sflag, size = 0x4, scoped, tag = 'scoped memory for tpu_custom_call.1']
    #allocation13 [shape = 'u8[4096]{0}', space=vmem, size = 0x1000, scoped, tag = 'output window, operand 0, single buffered']
    %13 = vsyncpa [#allocation3], 0
    %14 = vsyncpa [#allocation6], 0
    %15 = vsyncpa [#allocation9], 0
    %16 = vsyncpa [#allocation12], 0
    %17 = vsyncpa [#allocation4], 0
    // Predicated region
    $region2: #{tpu_custom_call.1} parent=1 // pred_check
      _
    $region3: #{tpu_custom_call.1} parent=1 // pred_check_branch
      %19 = sbr.rel (0) target = $region5
    $region4: #{tpu_custom_call.1} parent=1 // pred_region
      %s21 = ssub.s32 128, 128
      %22 = vsyncadd [#allocation3], %s21
      %s24 = sshll.u32 [#allocation2], 4
      %s25 = int_to_ptr.vmem [resolvable:$true] %s24
      %27 = dma.hbm_to_vmem [thread:$0]  %s0, 128, %s25, [#allocation3]
    $region5: #{tpu_custom_call.1} parent=1 // pred_fallthru
      _
    // Predicated region
    $region6: #{tpu_custom_call.1} parent=1 // pred_check
      _
    $region7: #{tpu_custom_call.1} parent=1 // pred_check_branch
      %29 = sbr.rel (0) target = $region9
    $region8: #{tpu_custom_call.1} parent=1 // pred_region
      %s31 = ssub.s32 128, 128
      %32 = vsyncadd [#allocation6], %s31
      %s34 = sshll.u32 [#allocation5], 4
      %s35 = int_to_ptr.vmem [resolvable:$true] %s34
      %37 = dma.hbm_to_vmem [thread:$0]  %s1, 128, %s35, [#allocation6]
    $region9: #{tpu_custom_call.1} parent=1 // pred_fallthru
      _
    // Predicated region
    $region10: #{tpu_custom_call.1} parent=1 // pred_check
      _
    $region11: #{tpu_custom_call.1} parent=1 // pred_check_branch
      %39 = sbr.rel (0) target = $region13
    $region12: #{tpu_custom_call.1} parent=1 // pred_region
      %s41 = ssub.s32 128, 128
      %42 = vsyncadd [#allocation6], %s41
      %s43 = sshll.u32 [#allocation7], 4
      %s44 = int_to_ptr.vmem [resolvable:$true] %s43
      %49 = dma.hbm_to_vmem [thread:$0]  %s2, 128, %s44, [#allocation6], 64, 64, 4
    $region13: #{tpu_custom_call.1} parent=1 // pred_fallthru
      _
    // Predicated region
    $region14: #{tpu_custom_call.1} parent=1 // pred_check
      _
    $region15: #{tpu_custom_call.1} parent=1 // pred_check_branch
      %51 = sbr.rel (0) target = $region17
    $region16: #{tpu_custom_call.1} parent=1 // pred_region
      _
    $region17: #{tpu_custom_call.1} parent=1 // pred_fallthru
      _
    // Predicated region
    $region18: #{tpu_custom_call.1} parent=1 // pred_check
      _
    $region19: #{tpu_custom_call.1} parent=1 // pred_check_branch
      %53 = sbr.rel (0) target = $region21
    $region20: #{tpu_custom_call.1} parent=1 // pred_region
      %s55 = ssub.s32 1024, 1024
      %56 = vsyncadd [#allocation9], %s55
      %s57 = sshll.u32 [#allocation8], 4
      %s58 = int_to_ptr.vmem [resolvable:$true] %s57
      %63 = dma.hbm_to_vmem [thread:$0]  %s4, 1024, %s58, [#allocation9], 64, 64, 4
    $region21: #{tpu_custom_call.1} parent=1 // pred_fallthru
      _
    // Predicated region
    $region22: #{tpu_custom_call.1} parent=1 // pred_check
      _
    $region23: #{tpu_custom_call.1} parent=1 // pred_check_branch
      %65 = sbr.rel (0) target = $region25
    $region24: #{tpu_custom_call.1} parent=1 // pred_region
      %s67 = ssub.s32 1024, 1024
      %68 = vsyncadd [#allocation9], %s67
      %s69 = sshll.u32 [#allocation10], 4
      %s70 = int_to_ptr.vmem [resolvable:$true] %s69
      %75 = dma.hbm_to_vmem [thread:$0]  %s5, 1024, %s70, [#allocation9], 64, 64, 4
    $region25: #{tpu_custom_call.1} parent=1 // pred_fallthru
      _
    // Predicated region
    $region26: #{tpu_custom_call.1} parent=1 // pred_check
      _
    $region27: #{tpu_custom_call.1} parent=1 // pred_check_branch
      %77 = sbr.rel (0) target = $region29
    $region28: #{tpu_custom_call.1} parent=1 // pred_region
      %s79 = ssub.s32 1024, 1024
      %80 = vsyncadd [#allocation12], %s79
      %s81 = sshll.u32 [#allocation11], 4
      %s82 = int_to_ptr.vmem [resolvable:$true] %s81
      %87 = dma.hbm_to_vmem [thread:$0]  %s6, 1024, %s82, [#allocation12], 64, 64, 4
    $region29: #{tpu_custom_call.1} parent=1 // pred_fallthru
      _
    // Predicated region
    $region30: #{tpu_custom_call.1} parent=1 // pred_check
      _
    $region31: #{tpu_custom_call.1} parent=1 // pred_check_branch
      %89 = sbr.rel (0) target = $region33
    $region32: #{tpu_custom_call.1} parent=1 // pred_region
      _
    $region33: #{tpu_custom_call.1} parent=1 // pred_fallthru
      _
    // Predicated region
    $region34: #{tpu_custom_call.1} parent=1 // pred_check
      _
    $region35: #{tpu_custom_call.1} parent=1 // pred_check_branch
      %91 = sbr.rel (0) target = $region37
    $region36: #{tpu_custom_call.1} parent=1 // pred_region
      %92 = dma.done [#allocation3], 128
    $region37: #{tpu_custom_call.1} parent=1 // pred_fallthru
      _
    // Predicated region
    $region38: #{tpu_custom_call.1} parent=1 // pred_check
      _
    $region39: #{tpu_custom_call.1} parent=1 // pred_check_branch
      %94 = sbr.rel (0) target = $region41
    $region40: #{tpu_custom_call.1} parent=1 // pred_region
      %95 = dma.done [#allocation6], 128
    $region41: #{tpu_custom_call.1} parent=1 // pred_fallthru
      _
    // Predicated region
    $region42: #{tpu_custom_call.1} parent=1 // pred_check
      _
    $region43: #{tpu_custom_call.1} parent=1 // pred_check_branch
      %97 = sbr.rel (0) target = $region45
    $region44: #{tpu_custom_call.1} parent=1 // pred_region
      %98 = dma.done [#allocation6], 128
    $region45: #{tpu_custom_call.1} parent=1 // pred_fallthru
      _
    // Predicated region
    $region46: #{tpu_custom_call.1} parent=1 // pred_check
      _
    $region47: #{tpu_custom_call.1} parent=1 // pred_check_branch
      %100 = sbr.rel (0) target = $region49
    $region48: #{tpu_custom_call.1} parent=1 // pred_region
      %101 = dma.done [#allocation9], 1024
    $region49: #{tpu_custom_call.1} parent=1 // pred_fallthru
      _
    // Predicated region
    $region50: #{tpu_custom_call.1} parent=1 // pred_check
      _
    $region51: #{tpu_custom_call.1} parent=1 // pred_check_branch
      %103 = sbr.rel (0) target = $region53
    $region52: #{tpu_custom_call.1} parent=1 // pred_region
      %104 = dma.done [#allocation9], 1024
    $region53: #{tpu_custom_call.1} parent=1 // pred_fallthru
      _
    // Predicated region
    $region54: #{tpu_custom_call.1} parent=1 // pred_check
      _
    $region55: #{tpu_custom_call.1} parent=1 // pred_check_branch
      %106 = sbr.rel (0) target = $region57
    $region56: #{tpu_custom_call.1} parent=1 // pred_region
      %107 = dma.done [#allocation12], 1024
    $region57: #{tpu_custom_call.1} parent=1 // pred_fallthru
      _
    %v109 = vld [vmem:[#allocation2] sm:$0xff]
    %v110 = vpack.c.bf16 %v109, %v109
    %v111 = vld [vmem:[#allocation5] sm:$0xff]
    %v112 = vpack.c.bf16 %v111, %v111
    %v113 = vld [vmem:[#allocation7] sm:$0xf]
    %v114 = vld [vmem:[#allocation7 + $0x4] sm:$0x1]
    %v115 = vld [vmem:[%s3] sm:$0xf]
    %v116 = vld [vmem:[%s3 + $0x4] sm:$0x1]
    %v119 = vunpack.c.l.b16 %v115
    %v120 = vunpack.c.l.b16 %v116
    %v121 = vpack.c.b16 %v120, %v119
    %vm122 = vcmask 80896
    %v124 = vsel %vm122, %v112, 0
    %vm126 = vcmask 1044480
    %v128 = vsel %vm126, %v121, 0
    %130 = vmatprep.subr.bf16.mxu0 0
    %131 = vmatpush1.bf16.msra.mxu0 %v128
    %132 = vmatprep.subr.bf16.mxu0 0
    %133 = vmatpush1.bf16.msra.mxu0 0
    %134 = vmatprep.subr.bf16.mxu0 0
    %135 = vmatpush1.bf16.msra.mxu0 0
    %136 = vmatprep.subr.bf16.mxu0 0
    %137 = vmatpush1.bf16.msra.mxu0 0
    %138 = vmatprep.subr.bf16.mxu0 0
    %139 = vmatpush1.bf16.msra.mxu0 0
    %140 = vmatprep.subr.bf16.mxu0 0
    %141 = vmatpush1.bf16.msra.mxu0 0
    %142 = vmatprep.subr.bf16.mxu0 0
    %143 = vmatpush1.bf16.msra.mxu0 0
    %144 = vmatprep.subr.bf16.mxu0 0
    %145 = vmatpush1.bf16.msra.mxu0 0
    %146 = vmatprep.subr.bf16.mxu0 0
    %147 = vmatpush1.bf16.msra.mxu0 0
    %148 = vmatprep.subr.bf16.mxu0 0
    %149 = vmatpush1.bf16.msra.mxu0 0
    %150 = vmatprep.subr.bf16.mxu0 0
    %151 = vmatpush1.bf16.msra.mxu0 0
    %152 = vmatprep.subr.bf16.mxu0 0
    %153 = vmatpush1.bf16.msra.mxu0 0
    %154 = vmatprep.subr.bf16.mxu0 0
    %155 = vmatpush1.bf16.msra.mxu0 0
    %156 = vmatprep.subr.bf16.mxu0 0
    %157 = vmatpush1.bf16.msra.mxu0 0
    %158 = vmatprep.subr.bf16.mxu0 0
    %159 = vmatpush1.bf16.msra.mxu0 0
    %160 = vmatprep.subr.bf16.mxu0 0
    %161 = vmatpush1.bf16.msra.mxu0 0
    %162 = vmatprep.mubr.bf16.mxu0 0
    %163 = vmatmul.mubr.bf16.gmra.mrb[0].mxu0 %v124
    %v164 = vpop.f32.mrb[0].mxu0
    %v165 = vadd.f32 0.0, %v164
    %v166 = vpop.f32.mrb[0].mxu0
    %v167 = vpop.f32.mrb[0].mxu0
    %v168 = vpop.f32.mrb[0].mxu0
    %169 = vdwg.mxu0
    %v172 = vunpack.c.l.b16 %v113
    %v173 = vunpack.c.l.b16 %v114
    %v174 = vpack.c.b16 %v173, %v172
    %v176 = vsel %vm122, %v110, 0
    %v179 = vsel %vm126, %v174, 0
    %181 = vmatprep.subr.bf16.mxu0 0
    %182 = vmatpush1.bf16.msra.mxu0 %v179
    %183 = vmatprep.subr.bf16.mxu0 0
    %184 = vmatpush1.bf16.msra.mxu0 0
    %185 = vmatprep.subr.bf16.mxu0 0
    %186 = vmatpush1.bf16.msra.mxu0 0
    %187 = vmatprep.subr.bf16.mxu0 0
    %188 = vmatpush1.bf16.msra.mxu0 0
    %189 = vmatprep.subr.bf16.mxu0 0
    %190 = vmatpush1.bf16.msra.mxu0 0
    %191 = vmatprep.subr.bf16.mxu0 0
    %192 = vmatpush1.bf16.msra.mxu0 0
    %193 = vmatprep.subr.bf16.mxu0 0
    %194 = vmatpush1.bf16.msra.mxu0 0
    %195 = vmatprep.subr.bf16.mxu0 0
    %196 = vmatpush1.bf16.msra.mxu0 0
    %197 = vmatprep.subr.bf16.mxu0 0
    %198 = vmatpush1.bf16.msra.mxu0 0
    %199 = vmatprep.subr.bf16.mxu0 0
    %200 = vmatpush1.bf16.msra.mxu0 0
    %201 = vmatprep.subr.bf16.mxu0 0
    %202 = vmatpush1.bf16.msra.mxu0 0
    %203 = vmatprep.subr.bf16.mxu0 0
    %204 = vmatpush1.bf16.msra.mxu0 0
    %205 = vmatprep.subr.bf16.mxu0 0
    %206 = vmatpush1.bf16.msra.mxu0 0
    %207 = vmatprep.subr.bf16.mxu0 0
    %208 = vmatpush1.bf16.msra.mxu0 0
    %209 = vmatprep.subr.bf16.mxu0 0
    %210 = vmatpush1.bf16.msra.mxu0 0
    %211 = vmatprep.subr.bf16.mxu0 0
    %212 = vmatpush1.bf16.msra.mxu0 0
    %213 = vmatprep.mubr.bf16.mxu0 0
    %214 = vmatmul.mubr.bf16.gmra.mrb[0].mxu0 %v176
    %v215 = vpop.f32.mrb[0].mxu0
    %v216 = vadd.f32 %v165, %v215
    %v217 = vpop.f32.mrb[0].mxu0
    %v218 = vpop.f32.mrb[0].mxu0
    %v219 = vpop.f32.mrb[0].mxu0
    %220 = vdwg.mxu0
    %v221 = vld [vmem:[%s7] sm:$0x1]
    %v222 = vld [vmem:[%s7 + $0x1] sm:$0x1]
    %v223 = vrot.slane %v216, 4
    %v224 = vadd.f32 %v216, %v223
    %v225 = vrot.slane %v224, 2
    %v226 = vadd.f32 %v224, %v225
    %v227 = vrot.slane %v226, 1
    %v228 = vadd.f32 %v226, %v227
    %v229 = vrcp.pop 8.0
    %v230 = vmul.f32 %v228, %v229
    %v231 = vmul.f32 %v216, %v216
    %v232 = vrot.slane %v231, 4
    %v233 = vadd.f32 %v231, %v232
    %v234 = vrot.slane %v233, 2
    %v235 = vadd.f32 %v233, %v234
    %v236 = vrot.slane %v235, 1
    %v237 = vadd.f32 %v235, %v236
    %v238 = vmul.f32 %v237, %v229
    %v239 = vmul.f32 %v230, %v230
    %v240 = vsub.f32 %v238, %v239
    %v241 = vmax.f32 %v240, 0.0
    %v242 = vadd.f32 %v241, 1e-05
    %v243 = vrsqrt.pop %v242
    %v244 = vmul.f32 %v221, %v243
    %v245 = vmul.f32 %v230, %v244
    %v246 = vsub.f32 %v222, %v245
    %v247 = vlaneseq
    %v248 = vshrl.u32 %v247, 7
    %v249 = vsub.s32 0, %v248
    %v250 = vrot.slane %v244, %v249
    %v251 = vmul.f32 %v216, %v250
    %v252 = vlaneseq
    %v253 = vshrl.u32 %v252, 7
    %v254 = vsub.s32 0, %v253
    %v255 = vrot.slane %v246, %v254
    %v256 = vadd.f32 %v251, %v255
    %v257 = vsub.f32 0.0, %v256
    %v258 = vmul.f32 %v257, 1.442695
    %v259 = vpow.pop %v258
    %v260 = vadd.f32 %v259, 1.0
    %v261 = vrcp.pop %v260
    %v262 = vpack.c.bf16 %v261, %v261
    %v263 = vld [vmem:[#allocation8] sm:$0xf]
    %v264 = vld [vmem:[#allocation8 + $0x4] sm:$0xf]
    %v265 = vld [vmem:[#allocation8 + $0x8] sm:$0xf]
    %v266 = vld [vmem:[#allocation8 + $0xc] sm:$0xf]
    %v267 = vld [vmem:[#allocation8 + $0x10] sm:$0xf]
    %v268 = vld [vmem:[#allocation8 + $0x14] sm:$0xf]
    %v269 = vld [vmem:[#allocation8 + $0x18] sm:$0xf]
    %v270 = vld [vmem:[#allocation8 + $0x1c] sm:$0xf]
    %v271 = vld [vmem:[#allocation8 + $0x20] sm:$0xf]
    %v272 = vld [vmem:[#allocation8 + $0x24] sm:$0xf]
    %v273 = vld [vmem:[#allocation8 + $0x28] sm:$0xf]
    %v274 = vld [vmem:[#allocation8 + $0x2c] sm:$0xf]
    %v275 = vld [vmem:[#allocation8 + $0x30] sm:$0xf]
    %v276 = vld [vmem:[#allocation8 + $0x34] sm:$0xf]
    %v277 = vld [vmem:[#allocation8 + $0x38] sm:$0xf]
    %v278 = vld [vmem:[#allocation8 + $0x3c] sm:$0xf]
    %v295 = vunpack.c.l.b16 %v263
    %v296 = vunpack.c.l.b16 %v264
    %v297 = vunpack.c.l.b16 %v265
    %v298 = vunpack.c.l.b16 %v266
    %v299 = vunpack.c.l.b16 %v267
    %v300 = vunpack.c.l.b16 %v268
    %v301 = vunpack.c.l.b16 %v269
    %v302 = vunpack.c.l.b16 %v270
    %v303 = vunpack.c.l.b16 %v271
    %v304 = vunpack.c.l.b16 %v272
    %v305 = vunpack.c.l.b16 %v273
    %v306 = vunpack.c.l.b16 %v274
    %v307 = vunpack.c.l.b16 %v275
    %v308 = vunpack.c.l.b16 %v276
    %v309 = vunpack.c.l.b16 %v277
    %v310 = vunpack.c.l.b16 %v278
    %v311 = vpack.c.b16 %v296, %v295
    %v312 = vpack.c.b16 %v298, %v297
    %v313 = vpack.c.b16 %v300, %v299
    %v314 = vpack.c.b16 %v302, %v301
    %v315 = vpack.c.b16 %v304, %v303
    %v316 = vpack.c.b16 %v306, %v305
    %v317 = vpack.c.b16 %v308, %v307
    %v318 = vpack.c.b16 %v310, %v309
    %327 = vmatprep.subr.bf16.mxu0 0
    %328 = vmatpush1.bf16.msra.mxu0 %v311
    %329 = vmatprep.subr.bf16.mxu0 0
    %330 = vmatpush1.bf16.msra.mxu0 %v312
    %331 = vmatprep.subr.bf16.mxu0 0
    %332 = vmatpush1.bf16.msra.mxu0 %v313
    %333 = vmatprep.subr.bf16.mxu0 0
    %334 = vmatpush1.bf16.msra.mxu0 %v314
    %335 = vmatprep.subr.bf16.mxu0 0
    %336 = vmatpush1.bf16.msra.mxu0 %v315
    %337 = vmatprep.subr.bf16.mxu0 0
    %338 = vmatpush1.bf16.msra.mxu0 %v316
    %339 = vmatprep.subr.bf16.mxu0 0
    %340 = vmatpush1.bf16.msra.mxu0 %v317
    %341 = vmatprep.subr.bf16.mxu0 0
    %342 = vmatpush1.bf16.msra.mxu0 %v318
    %343 = vmatprep.subr.bf16.mxu0 0
    %344 = vmatpush1.bf16.msra.mxu0 0
    %345 = vmatprep.subr.bf16.mxu0 0
    %346 = vmatpush1.bf16.msra.mxu0 0
    %347 = vmatprep.subr.bf16.mxu0 0
    %348 = vmatpush1.bf16.msra.mxu0 0
    %349 = vmatprep.subr.bf16.mxu0 0
    %350 = vmatpush1.bf16.msra.mxu0 0
    %351 = vmatprep.subr.bf16.mxu0 0
    %352 = vmatpush1.bf16.msra.mxu0 0
    %353 = vmatprep.subr.bf16.mxu0 0
    %354 = vmatpush1.bf16.msra.mxu0 0
    %355 = vmatprep.subr.bf16.mxu0 0
    %356 = vmatpush1.bf16.msra.mxu0 0
    %357 = vmatprep.subr.bf16.mxu0 0
    %358 = vmatpush1.bf16.msra.mxu0 0
    %359 = vmatprep.mubr.bf16.mxu0 0
    %360 = vmatmul.mubr.bf16.gmra.mrb[0].mxu0 %v262
    %v361 = vpop.f32.mrb[0].mxu0
    %v362 = vadd.f32 0.0, %v361
    %v363 = vpop.f32.mrb[0].mxu0
    %v364 = vpop.f32.mrb[0].mxu0
    %v365 = vpop.f32.mrb[0].mxu0
    %366 = vdwg.mxu0
    %v367 = vld [vmem:[%s7 + $0x2] sm:$0x1]
    %v368 = vld [vmem:[%s7 + $0x3] sm:$0x1]
    %v369 = vrot.slane %v362, 4
    %v370 = vadd.f32 %v362, %v369
    %v371 = vrot.slane %v370, 2
    %v372 = vadd.f32 %v370, %v371
    %v373 = vrot.slane %v372, 1
    %v374 = vadd.f32 %v372, %v373
    %v375 = vmul.f32 %v374, %v229
    %v376 = vmul.f32 %v362, %v362
    %v377 = vrot.slane %v376, 4
    %v378 = vadd.f32 %v376, %v377
    %v379 = vrot.slane %v378, 2
    %v380 = vadd.f32 %v378, %v379
    %v381 = vrot.slane %v380, 1
    %v382 = vadd.f32 %v380, %v381
    %v383 = vmul.f32 %v382, %v229
    %v384 = vmul.f32 %v375, %v375
    %v385 = vsub.f32 %v383, %v384
    %v386 = vmax.f32 %v385, 0.0
    %v387 = vadd.f32 %v386, 1e-05
    %v388 = vrsqrt.pop %v387
    %v389 = vmul.f32 %v367, %v388
    %v390 = vmul.f32 %v375, %v389
    %v391 = vsub.f32 %v368, %v390
    %v392 = vlaneseq
    %v393 = vshrl.u32 %v392, 7
    %v394 = vsub.s32 0, %v393
    %v395 = vrot.slane %v389, %v394
    %v396 = vmul.f32 %v362, %v395
    %v397 = vlaneseq
    %v398 = vshrl.u32 %v397, 7
    %v399 = vsub.s32 0, %v398
    %v400 = vrot.slane %v391, %v399
    %v401 = vadd.f32 %v396, %v400
    %v402 = vsub.f32 0.0, %v401
    %v403 = vmul.f32 %v402, 1.442695
    %v404 = vpow.pop %v403
    %v405 = vadd.f32 %v404, 1.0
    %v406 = vrcp.pop %v405
    %v407 = vpack.c.bf16 %v406, %v406
    %v408 = vld [vmem:[#allocation10] sm:$0xf]
    %v409 = vld [vmem:[#allocation10 + $0x4] sm:$0xf]
    %v410 = vld [vmem:[#allocation10 + $0x8] sm:$0xf]
    %v411 = vld [vmem:[#allocation10 + $0xc] sm:$0xf]
    %v412 = vld [vmem:[#allocation10 + $0x10] sm:$0xf]
    %v413 = vld [vmem:[#allocation10 + $0x14] sm:$0xf]
    %v414 = vld [vmem:[#allocation10 + $0x18] sm:$0xf]
    %v415 = vld [vmem:[#allocation10 + $0x1c] sm:$0xf]
    %v416 = vld [vmem:[#allocation10 + $0x20] sm:$0xf]
    %v417 = vld [vmem:[#allocation10 + $0x24] sm:$0xf]
    %v418 = vld [vmem:[#allocation10 + $0x28] sm:$0xf]
    %v419 = vld [vmem:[#allocation10 + $0x2c] sm:$0xf]
    %v420 = vld [vmem:[#allocation10 + $0x30] sm:$0xf]
    %v421 = vld [vmem:[#allocation10 + $0x34] sm:$0xf]
    %v422 = vld [vmem:[#allocation10 + $0x38] sm:$0xf]
    %v423 = vld [vmem:[#allocation10 + $0x3c] sm:$0xf]
    %v440 = vunpack.c.l.b16 %v408
    %v441 = vunpack.c.l.b16 %v409
    %v442 = vunpack.c.l.b16 %v410
    %v443 = vunpack.c.l.b16 %v411
    %v444 = vunpack.c.l.b16 %v412
    %v445 = vunpack.c.l.b16 %v413
    %v446 = vunpack.c.l.b16 %v414
    %v447 = vunpack.c.l.b16 %v415
    %v448 = vunpack.c.l.b16 %v416
    %v449 = vunpack.c.l.b16 %v417
    %v450 = vunpack.c.l.b16 %v418
    %v451 = vunpack.c.l.b16 %v419
    %v452 = vunpack.c.l.b16 %v420
    %v453 = vunpack.c.l.b16 %v421
    %v454 = vunpack.c.l.b16 %v422
    %v455 = vunpack.c.l.b16 %v423
    %v456 = vpack.c.b16 %v441, %v440
    %v457 = vpack.c.b16 %v443, %v442
    %v458 = vpack.c.b16 %v445, %v444
    %v459 = vpack.c.b16 %v447, %v446
    %v460 = vpack.c.b16 %v449, %v448
    %v461 = vpack.c.b16 %v451, %v450
    %v462 = vpack.c.b16 %v453, %v452
    %v463 = vpack.c.b16 %v455, %v454
    %472 = vmatprep.subr.bf16.mxu0 0
    %473 = vmatpush1.bf16.msra.mxu0 %v456
    %474 = vmatprep.subr.bf16.mxu0 0
    %475 = vmatpush1.bf16.msra.mxu0 %v457
    %476 = vmatprep.subr.bf16.mxu0 0
    %477 = vmatpush1.bf16.msra.mxu0 %v458
    %478 = vmatprep.subr.bf16.mxu0 0
    %479 = vmatpush1.bf16.msra.mxu0 %v459
    %480 = vmatprep.subr.bf16.mxu0 0
    %481 = vmatpush1.bf16.msra.mxu0 %v460
    %482 = vmatprep.subr.bf16.mxu0 0
    %483 = vmatpush1.bf16.msra.mxu0 %v461
    %484 = vmatprep.subr.bf16.mxu0 0
    %485 = vmatpush1.bf16.msra.mxu0 %v462
    %486 = vmatprep.subr.bf16.mxu0 0
    %487 = vmatpush1.bf16.msra.mxu0 %v463
    %488 = vmatprep.subr.bf16.mxu0 0
    %489 = vmatpush1.bf16.msra.mxu0 0
    %490 = vmatprep.subr.bf16.mxu0 0
    %491 = vmatpush1.bf16.msra.mxu0 0
    %492 = vmatprep.subr.bf16.mxu0 0
    %493 = vmatpush1.bf16.msra.mxu0 0
    %494 = vmatprep.subr.bf16.mxu0 0
    %495 = vmatpush1.bf16.msra.mxu0 0
    %496 = vmatprep.subr.bf16.mxu0 0
    %497 = vmatpush1.bf16.msra.mxu0 0
    %498 = vmatprep.subr.bf16.mxu0 0
    %499 = vmatpush1.bf16.msra.mxu0 0
    %500 = vmatprep.subr.bf16.mxu0 0
    %501 = vmatpush1.bf16.msra.mxu0 0
    %502 = vmatprep.subr.bf16.mxu0 0
    %503 = vmatpush1.bf16.msra.mxu0 0
    %504 = vmatprep.mubr.bf16.mxu0 0
    %505 = vmatmul.mubr.bf16.gmra.mrb[0].mxu0 %v407
    %v506 = vpop.f32.mrb[0].mxu0
    %v507 = vadd.f32 0.0, %v506
    %v508 = vpop.f32.mrb[0].mxu0
    %v509 = vpop.f32.mrb[0].mxu0
    %v510 = vpop.f32.mrb[0].mxu0
    %511 = vdwg.mxu0
    %v512 = vld [vmem:[%s7 + $0x4] sm:$0x1]
    %v513 = vld [vmem:[%s7 + $0x5] sm:$0x1]
    %v514 = vrot.slane %v507, 4
    %v515 = vadd.f32 %v507, %v514
    %v516 = vrot.slane %v515, 2
    %v517 = vadd.f32 %v515, %v516
    %v518 = vrot.slane %v517, 1
    %v519 = vadd.f32 %v517, %v518
    %v520 = vmul.f32 %v519, %v229
    %v521 = vmul.f32 %v507, %v507
    %v522 = vrot.slane %v521, 4
    %v523 = vadd.f32 %v521, %v522
    %v524 = vrot.slane %v523, 2
    %v525 = vadd.f32 %v523, %v524
    %v526 = vrot.slane %v525, 1
    %v527 = vadd.f32 %v525, %v526
    %v528 = vmul.f32 %v527, %v229
    %v529 = vmul.f32 %v520, %v520
    %v530 = vsub.f32 %v528, %v529
    %v531 = vmax.f32 %v530, 0.0
    %v532 = vadd.f32 %v531, 1e-05
    %v533 = vrsqrt.pop %v532
    %v534 = vmul.f32 %v512, %v533
    %v535 = vmul.f32 %v520, %v534
    %v536 = vsub.f32 %v513, %v535
    %v537 = vlaneseq
    %v538 = vshrl.u32 %v537, 7
    %v539 = vsub.s32 0, %v538
    %v540 = vrot.slane %v534, %v539
    %v541 = vmul.f32 %v507, %v540
    %v542 = vlaneseq
    %v543 = vshrl.u32 %v542, 7
    %v544 = vsub.s32 0, %v543
    %v545 = vrot.slane %v536, %v544
    %v546 = vadd.f32 %v541, %v545
    %v547 = vsub.f32 0.0, %v546
    %v548 = vmul.f32 %v547, 1.442695
    %v549 = vpow.pop %v548
    %v550 = vadd.f32 %v549, 1.0
    %v551 = vrcp.pop %v550
    %v552 = vpack.c.bf16 %v551, %v551
    %v553 = vld [vmem:[#allocation11] sm:$0xf]
    %v554 = vld [vmem:[#allocation11 + $0x4] sm:$0xf]
    %v555 = vld [vmem:[#allocation11 + $0x8] sm:$0xf]
    %v556 = vld [vmem:[#allocation11 + $0xc] sm:$0xf]
    %v557 = vld [vmem:[#allocation11 + $0x10] sm:$0xf]
    %v558 = vld [vmem:[#allocation11 + $0x14] sm:$0xf]
    %v559 = vld [vmem:[#allocation11 + $0x18] sm:$0xf]
    %v560 = vld [vmem:[#allocation11 + $0x1c] sm:$0xf]
    %v561 = vld [vmem:[#allocation11 + $0x20] sm:$0xf]
    %v562 = vld [vmem:[#allocation11 + $0x24] sm:$0xf]
    %v563 = vld [vmem:[#allocation11 + $0x28] sm:$0xf]
    %v564 = vld [vmem:[#allocation11 + $0x2c] sm:$0xf]
    %v565 = vld [vmem:[#allocation11 + $0x30] sm:$0xf]
    %v566 = vld [vmem:[#allocation11 + $0x34] sm:$0xf]
    %v567 = vld [vmem:[#allocation11 + $0x38] sm:$0xf]
    %v568 = vld [vmem:[#allocation11 + $0x3c] sm:$0xf]
    %v585 = vunpack.c.l.b16 %v553
    %v586 = vunpack.c.l.b16 %v554
    %v587 = vunpack.c.l.b16 %v555
    %v588 = vunpack.c.l.b16 %v556
    %v589 = vunpack.c.l.b16 %v557
    %v590 = vunpack.c.l.b16 %v558
    %v591 = vunpack.c.l.b16 %v559
    %v592 = vunpack.c.l.b16 %v560
    %v593 = vunpack.c.l.b16 %v561
    %v594 = vunpack.c.l.b16 %v562
    %v595 = vunpack.c.l.b16 %v563
    %v596 = vunpack.c.l.b16 %v564
    %v597 = vunpack.c.l.b16 %v565
    %v598 = vunpack.c.l.b16 %v566
    %v599 = vunpack.c.l.b16 %v567
    %v600 = vunpack.c.l.b16 %v568
    %v601 = vpack.c.b16 %v586, %v585
    %v602 = vpack.c.b16 %v588, %v587
    %v603 = vpack.c.b16 %v590, %v589
    %v604 = vpack.c.b16 %v592, %v591
    %v605 = vpack.c.b16 %v594, %v593
    %v606 = vpack.c.b16 %v596, %v595
    %v607 = vpack.c.b16 %v598, %v597
    %v608 = vpack.c.b16 %v600, %v599
    %617 = vmatprep.subr.bf16.mxu0 0
    %618 = vmatpush1.bf16.msra.mxu0 %v601
    %619 = vmatprep.subr.bf16.mxu0 0
    %620 = vmatpush1.bf16.msra.mxu0 %v602
    %621 = vmatprep.subr.bf16.mxu0 0
    %622 = vmatpush1.bf16.msra.mxu0 %v603
    %623 = vmatprep.subr.bf16.mxu0 0
    %624 = vmatpush1.bf16.msra.mxu0 %v604
    %625 = vmatprep.subr.bf16.mxu0 0
    %626 = vmatpush1.bf16.msra.mxu0 %v605
    %627 = vmatprep.subr.bf16.mxu0 0
    %628 = vmatpush1.bf16.msra.mxu0 %v606
    %629 = vmatprep.subr.bf16.mxu0 0
    %630 = vmatpush1.bf16.msra.mxu0 %v607
    %631 = vmatprep.subr.bf16.mxu0 0
    %632 = vmatpush1.bf16.msra.mxu0 %v608
    %633 = vmatprep.subr.bf16.mxu0 0
    %634 = vmatpush1.bf16.msra.mxu0 0
    %635 = vmatprep.subr.bf16.mxu0 0
    %636 = vmatpush1.bf16.msra.mxu0 0
    %637 = vmatprep.subr.bf16.mxu0 0
    %638 = vmatpush1.bf16.msra.mxu0 0
    %639 = vmatprep.subr.bf16.mxu0 0
    %640 = vmatpush1.bf16.msra.mxu0 0
    %641 = vmatprep.subr.bf16.mxu0 0
    %642 = vmatpush1.bf16.msra.mxu0 0
    %643 = vmatprep.subr.bf16.mxu0 0
    %644 = vmatpush1.bf16.msra.mxu0 0
    %645 = vmatprep.subr.bf16.mxu0 0
    %646 = vmatpush1.bf16.msra.mxu0 0
    %647 = vmatprep.subr.bf16.mxu0 0
    %648 = vmatpush1.bf16.msra.mxu0 0
    %649 = vmatprep.mubr.bf16.mxu0 0
    %650 = vmatmul.mubr.bf16.gmra.mrb[0].mxu0 %v552
    %v651 = vpop.f32.mrb[0].mxu0
    %v652 = vadd.f32 0.0, %v651
    %v653 = vpop.f32.mrb[0].mxu0
    %v654 = vpop.f32.mrb[0].mxu0
    %v655 = vpop.f32.mrb[0].mxu0
    %656 = vdwg.mxu0
    %v657 = vld [vmem:[%s7 + $0x6] sm:$0x1]
    %v658 = vld [vmem:[%s7 + $0x7] sm:$0x1]
    %v659 = vrot.slane %v652, 4
    %v660 = vadd.f32 %v652, %v659
    %v661 = vrot.slane %v660, 2
    %v662 = vadd.f32 %v660, %v661
    %v663 = vrot.slane %v662, 1
    %v664 = vadd.f32 %v662, %v663
    %v665 = vmul.f32 %v664, %v229
    %v666 = vmul.f32 %v652, %v652
    %v667 = vrot.slane %v666, 4
    %v668 = vadd.f32 %v666, %v667
    %v669 = vrot.slane %v668, 2
    %v670 = vadd.f32 %v668, %v669
    %v671 = vrot.slane %v670, 1
    %v672 = vadd.f32 %v670, %v671
    %v673 = vmul.f32 %v672, %v229
    %v674 = vmul.f32 %v665, %v665
    %v675 = vsub.f32 %v673, %v674
    %v676 = vmax.f32 %v675, 0.0
    %v677 = vadd.f32 %v676, 1e-05
    %v678 = vrsqrt.pop %v677
    %v679 = vmul.f32 %v657, %v678
    %v680 = vmul.f32 %v665, %v679
    %v681 = vsub.f32 %v658, %v680
    %v682 = vlaneseq
    %v683 = vshrl.u32 %v682, 7
    %v684 = vsub.s32 0, %v683
    %v685 = vrot.slane %v679, %v684
    %v686 = vmul.f32 %v652, %v685
    %v687 = vlaneseq
    %v688 = vshrl.u32 %v687, 7
    %v689 = vsub.s32 0, %v688
    %v690 = vrot.slane %v681, %v689
    %v691 = vadd.f32 %v686, %v690
    %v692 = vsub.f32 0.0, %v691
    %v693 = vmul.f32 %v692, 1.442695
    %v694 = vpow.pop %v693
    %v695 = vadd.f32 %v694, 1.0
    %v696 = vrcp.pop %v695
    %697 = vst [vmem:[#allocation13] sm:$0xff] %v696
    // Predicated region
    $region58: #{tpu_custom_call.1} parent=1 // pred_check
      _
    $region59: #{tpu_custom_call.1} parent=1 // pred_check_branch
      %699 = sbr.rel (0) target = $region61
    $region60: #{tpu_custom_call.1} parent=1 // pred_region
      %s701 = ssub.s32 128, 128
      %702 = vsyncadd [#allocation4], %s701
      %s704 = sshll.u32 [#allocation13], 4
      %s705 = int_to_ptr.vmem [resolvable:$true] %s704
      %707 = dma.vmem_to_hbm [thread:$0]  %s705, 128, %s8, [#allocation4]
    $region61: #{tpu_custom_call.1} parent=1 // pred_fallthru
      _
    // Predicated region
    $region62: #{tpu_custom_call.1} parent=1 // pred_check
      _
    $region63: #{tpu_custom_call.1} parent=1 // pred_check_branch
      %709 = sbr.rel (0) target = $region65
    $region64: #{tpu_custom_call.1} parent=1 // pred_region
      %710 = dma.done [#allocation4], 128
    $region65: #{tpu_custom_call.1} parent=1 // pred_fallthru
      _
    %711 = vsyncpa [#allocation3], 1
    %712 = vsyncpa [#allocation6], 1
    %713 = vsyncpa [#allocation9], 1
    %714 = vsyncpa [#allocation12], 1
    %715 = vsyncpa [#allocation4], 1

</llo_original>
